<compile_context>
chip_gen: v6e
topology: v6e:2x2x1
jax: 0.10.0
libtpu: 0.0.40
codegen_flags: <defaults>
</compile_context>

<pallas_src>
import math

import numpy as np
import jax
import jax.numpy as jnp
from jax.experimental import pallas as pl
from jax.experimental.pallas import tpu as pltpu


# ----------------------------------------------------------------------------
# Fused Pallas kernel (one row-tile of nodes per grid step)
# ----------------------------------------------------------------------------
def _conv_layer_kernel(node_ref, nbr_ref, edge_ref, mask_ref,
                       w_self_ref, w_nbr_ref, w_edge_ref, b_ref, alpha_ref,
                       out_ref):
    """
    node_ref : (Tn, Fn)     f32   node features of this row tile
    nbr_ref  : (M, Tn, Fn)  bf16  gathered neighbour node features
    edge_ref : (M, Tn, Fe)  bf16  edge features (neighbour-slot major)
    mask_ref : (M, Tn, 1)   f32   1.0 where edge_fea_idx >= 0 else 0.0
    w_*_ref  : bf16 weight slices of fc_full (only the live "filter" half)
    b_ref    : (1, Fn)      f32   filter-half bias
    alpha_ref: (1,)         f32   scalar alpha, resident in SMEM
    out_ref  : (Tn, Fn)     f32
    """
    node = node_ref[...]                                        # (Tn, Fn) f32
    m = nbr_ref.shape[0]

    # Self contribution (+ bias) computed ONCE per node row, reused for all M
    # neighbour slots -> the old one-hot "broadcast" matmul is simply gone.
    a_self = jnp.dot(node.astype(jnp.bfloat16), w_self_ref[...],
                     preferred_element_type=jnp.float32) + b_ref[...]

    # z = alpha * node + sum_m mask * sigmoid(gated_m)^2
    acc = alpha_ref[0] * node                                   # (Tn, Fn) f32
    for mm in range(m):  # M is small & static: unrolled, leading-axis slices
        gated = (a_self
                 + jnp.dot(nbr_ref[mm], w_nbr_ref[...],
                           preferred_element_type=jnp.float32)
                 + jnp.dot(edge_ref[mm], w_edge_ref[...],
                           preferred_element_type=jnp.float32))  # (Tn, Fn)
        # sigmoid: exp (EUP) + EXACT reciprocal (EUP slot has huge slack here)
        filt = pl.reciprocal(1.0 + jnp.exp(-gated))
        acc = acc + filt * filt * mask_ref[mm]                   # VPU only

    # numerically stable softplus (log1p would be marginally more accurate but
    # log(1+x) is guaranteed to lower and the tail error is << tolerance)
    out_ref[...] = jnp.maximum(acc, 0.0) + jnp.log(1.0 + jnp.exp(-jnp.abs(acc)))


# ----------------------------------------------------------------------------
# Host wrapper: slices the live weight half, gathers neighbour rows once,
# lays data out (M, N, F) and launches the row-parallel fused kernel.
# ----------------------------------------------------------------------------
@jax.jit
def conv_layer_forward(params, node_in_fea, edge_fea, edge_fea_idx):
    n, m = edge_fea_idx.shape
    fn = node_in_fea.shape[1]
    fe = edge_fea.shape[2]

    # Row tile (v7x-safe default; v6e could take 512-1024, v5e prefers 128).
    tile_n = n if n <= 256 else 256

    # fc_full weight in torch layout (out = 2*Fn, in = 2*Fn + Fe); only the
    # "filter" half of the output is live in the reference forward.
    w_t = params["fc_w"].T                                       # (2Fn+Fe, 2Fn)
    w_self = w_t[:fn, :fn].astype(jnp.bfloat16)                  # (Fn, Fn)
    w_nbr = w_t[fn:2 * fn, :fn].astype(jnp.bfloat16)             # (Fn, Fn)
    w_edge = w_t[2 * fn:, :fn].astype(jnp.bfloat16)              # (Fe, Fn)
    b_filt = params["fc_b"][None, :fn].astype(jnp.float32)       # (1, Fn)

    # torch negative index -> last row; invalid edges masked out of the sum.
    idx_wrapped = jnp.where(edge_fea_idx < 0, edge_fea_idx + n, edge_fea_idx)
    mask = (edge_fea_idx >= 0).astype(jnp.float32).T[:, :, None]  # (M, N, 1)
    nbr = node_in_fea[idx_wrapped.T].astype(jnp.bfloat16)         # (M, N, Fn)
    edge = jnp.transpose(edge_fea, (1, 0, 2)).astype(jnp.bfloat16)  # (M, N, Fe)
    node = node_in_fea.astype(jnp.float32)                        # (N, Fn)
    alpha = params["alpha"].reshape(1).astype(jnp.float32)        # (1,) -> SMEM

    grid = (pl.cdiv(n, tile_n),)

    def resident(shape):  # weights / bias: constant block index -> stay in VMEM
        return pl.BlockSpec(shape, lambda i: (0, 0))

    return pl.pallas_call(
        _conv_layer_kernel,
        out_shape=jax.ShapeDtypeStruct((n, fn), jnp.float32),
        grid=grid,
        in_specs=[
            pl.BlockSpec((tile_n, fn), lambda i: (i, 0)),        # node tile (f32)
            pl.BlockSpec((m, tile_n, fn), lambda i: (0, i, 0)),  # gathered nbrs
            pl.BlockSpec((m, tile_n, fe), lambda i: (0, i, 0)),  # edge features
            pl.BlockSpec((m, tile_n, 1), lambda i: (0, i, 0)),   # edge mask
            resident((fn, fn)),                                  # W_self  (bf16)
            resident((fn, fn)),                                  # W_nbr   (bf16)
            resident((fe, fn)),                                  # W_edge  (bf16)
            resident((1, fn)),                                   # bias (filter)
            pl.BlockSpec(memory_space=pltpu.MemorySpace.SMEM),   # alpha scalar
        ],
        out_specs=pl.BlockSpec((tile_n, fn), lambda i: (i, 0)),
        compiler_params=pltpu.CompilerParams(
            dimension_semantics=("parallel",)),
    )(node, nbr, edge, mask, w_self, w_nbr, w_edge, b_filt, alpha)


# ----------------------------------------------------------------------------
# Pure-JAX reference (mirrors the PyTorch forward verbatim, bug included)
# ----------------------------------------------------------------------------
def reference_forward(params, node_in_fea, edge_fea, edge_fea_idx):
    n, m = edge_fea_idx.shape
    fn = node_in_fea.shape[1]
    idx = jnp.where(edge_fea_idx < 0, edge_fea_idx + n, edge_fea_idx)
    node_edge_fea = node_in_fea[idx]                             # (N, M, Fn)
    self_fea = jnp.broadcast_to(node_in_fea[:, None, :], (n, m, fn))
    total = jnp.concatenate([self_fea, node_edge_fea, edge_fea], axis=2)
    gated = total @ params["fc_w"].T + params["fc_b"]
    nbr_filter, nbr_core = gated[..., :fn], gated[..., fn:]
    nbr_filter = jax.nn.sigmoid(nbr_filter)
    nbr_core = jax.nn.softplus(nbr_core)
    mask = (edge_fea_idx >= 0).astype(jnp.float32)[..., None]
    nbr_filter = nbr_filter * mask
    nbr_core = nbr_filter * mask          # reference overwrite kept verbatim
    nbr_sumed = jnp.sum(nbr_filter * nbr_core, axis=1)
    return jax.nn.softplus(params["alpha"] * node_in_fea + nbr_sumed)


# ----------------------------------------------------------------------------
# Deterministic parameter init (matches the module __init__)
# ----------------------------------------------------------------------------
def init_params(key, node_fea_len, edge_fea_len):
    fan_in = 2 * node_fea_len + edge_fea_len
    bound = math.sqrt(6.0 / fan_in)     # kaiming_uniform_(relu, fan_in)
    w = jax.random.uniform(key, (2 * node_fea_len, fan_in), jnp.float32,
                           -bound, bound)
    return {
        "fc_w": w,
        "fc_b": jnp.zeros((2 * node_fea_len,), jnp.float32),
        "alpha": jnp.asarray(0.7, jnp.float32),
    }


# ----------------------------------------------------------------------------
if __name__ == "__main__":
    node_fea_len, edge_fea_len = 128, 64      # lane-dense node features
    N, M = 8, 4

    key = jax.random.PRNGKey(0)
    k_param, k_node, k_edge = jax.random.split(key, 3)

    params = init_params(k_param, node_fea_len, edge_fea_len)
    node_in_fea = jax.random.normal(k_node, (N, node_fea_len), jnp.float32)
    edge_fea = jax.random.normal(k_edge, (N, M, edge_fea_len), jnp.float32)

    # neighbor index table with some -1 (missing) entries, like the reference
    edge_fea_idx = np.zeros((N, M), dtype=np.int32)
    for i in range(N):
        edge_fea_idx[i, 0] = (i + 1) % N
        edge_fea_idx[i, 1] = (i + 2) % N
        edge_fea_idx[i, 2] = (i + 3) % N if i % 2 == 0 else -1
        edge_fea_idx[i, 3] = -1 if i % 3 == 0 else (i + 4) % N
    edge_fea_idx = jnp.asarray(edge_fea_idx)

    out = conv_layer_forward(params, node_in_fea, edge_fea, edge_fea_idx)
    out = jax.block_until_ready(out)

    ref = reference_forward(params, node_in_fea, edge_fea, edge_fea_idx)
    # tolerance tightened vs previous version: exact sigmoid reciprocal;
    # remaining error is the bf16 MXU operands (f32 accumulation).
    np.testing.assert_allclose(np.asarray(out), np.asarray(ref),
                               rtol=2e-2, atol=2e-2)

    assert out.shape == (N, node_fea_len), out.shape
    assert bool(jnp.all(jnp.isfinite(out)))
    print("KERNEL_OK")
</pallas_src>

<mosaic_0001>
module attributes {stable_mosaic.version = 11 : i64} {
  func.func @_conv_layer_kernel(%arg0: i32, %arg1: memref<8x128xf32, #tpu.memory_space<vmem>>, %arg2: memref<4x8x128xbf16, #tpu.memory_space<vmem>>, %arg3: memref<4x8x64xbf16, #tpu.memory_space<vmem>>, %arg4: memref<4x8x1xf32, #tpu.memory_space<vmem>>, %arg5: memref<128x128xbf16, #tpu.memory_space<vmem>>, %arg6: memref<128x128xbf16, #tpu.memory_space<vmem>>, %arg7: memref<64x128xbf16, #tpu.memory_space<vmem>>, %arg8: memref<1x128xf32, #tpu.memory_space<vmem>>, %arg9: memref<1xf32, #tpu.memory_space<smem>>, %arg10: memref<8x128xf32, #tpu.memory_space<vmem>>) attributes {dimension_semantics = [#tpu.dimension_semantics<parallel>], iteration_bounds = array<i64: 1>, scalar_prefetch = 0 : i64, scratch_operands = 0 : i64, tpu.core_type = #tpu.core_type<tc>, window_params = [{transform_indices = @transform_0, window_bounds = array<i64: 8, 128>}, {transform_indices = @transform_1, window_bounds = array<i64: 4, 8, 128>}, {transform_indices = @transform_2, window_bounds = array<i64: 4, 8, 64>}, {transform_indices = @transform_3, window_bounds = array<i64: 4, 8, 1>}, {pipeline_mode = #tpu.pipeline_mode<synchronous>, transform_indices = @transform_4, window_bounds = array<i64: 128, 128>}, {pipeline_mode = #tpu.pipeline_mode<synchronous>, transform_indices = @transform_5, window_bounds = array<i64: 128, 128>}, {pipeline_mode = #tpu.pipeline_mode<synchronous>, transform_indices = @transform_6, window_bounds = array<i64: 64, 128>}, {pipeline_mode = #tpu.pipeline_mode<synchronous>, transform_indices = @transform_7, window_bounds = array<i64: 1, 128>}, {transform_indices = @transform_8, window_bounds = array<i64: 1>}, {transform_indices = @transform_9, window_bounds = array<i64: 8, 128>}]} {
    %c0 = arith.constant 0 : index
    %c0_0 = arith.constant 0 : index
    %0 = vector.load %arg1[%c0, %c0_0] : memref<8x128xf32, #tpu.memory_space<vmem>>, vector<8x128xf32>
    %1 = arith.truncf %0 : vector<8x128xf32> to vector<8x128xbf16>
    %c0_1 = arith.constant 0 : index
    %c0_2 = arith.constant 0 : index
    %2 = vector.load %arg5[%c0_1, %c0_2] : memref<128x128xbf16, #tpu.memory_space<vmem>>, vector<128x128xbf16>
    %cst = arith.constant dense<0.000000e+00> : vector<8x128xf32>
    %3 = tpu.matmul %1, %2, %cst {dimension_numbers = #tpu.dot_dimension_numbers<[1], [0], [0], [1], [0, 0, 1, 1], [], []>} : vector<8x128xbf16>, vector<128x128xbf16>, vector<8x128xf32> -> vector<8x128xf32>
    %c0_3 = arith.constant 0 : index
    %c0_4 = arith.constant 0 : index
    %4 = vector.load %arg8[%c0_3, %c0_4] : memref<1x128xf32, #tpu.memory_space<vmem>>, vector<1x128xf32>
    %5 = vector.broadcast %4 : vector<1x128xf32> to vector<8x128xf32>
    %6 = arith.addf %3, %5 : vector<8x128xf32>
    %c0_5 = arith.constant 0 : index
    %7 = memref.load %arg9[%c0_5] : memref<1xf32, #tpu.memory_space<smem>>
    %8 = vector.broadcast %7 : f32 to vector<8x128xf32>
    %9 = arith.mulf %8, %0 : vector<8x128xf32>
    %c0_6 = arith.constant 0 : index
    %c0_7 = arith.constant 0 : index
    %c0_8 = arith.constant 0 : index
    %10 = vector.load %arg2[%c0_6, %c0_7, %c0_8] : memref<4x8x128xbf16, #tpu.memory_space<vmem>>, vector<1x8x128xbf16>
    %11 = vector.shape_cast %10 : vector<1x8x128xbf16> to vector<8x128xbf16>
    %c0_9 = arith.constant 0 : index
    %c0_10 = arith.constant 0 : index
    %12 = vector.load %arg6[%c0_9, %c0_10] : memref<128x128xbf16, #tpu.memory_space<vmem>>, vector<128x128xbf16>
    %cst_11 = arith.constant dense<0.000000e+00> : vector<8x128xf32>
    %13 = tpu.matmul %11, %12, %cst_11 {dimension_numbers = #tpu.dot_dimension_numbers<[1], [0], [0], [1], [0, 0, 1, 1], [], []>} : vector<8x128xbf16>, vector<128x128xbf16>, vector<8x128xf32> -> vector<8x128xf32>
    %14 = arith.addf %6, %13 : vector<8x128xf32>
    %c0_12 = arith.constant 0 : index
    %c0_13 = arith.constant 0 : index
    %c0_14 = arith.constant 0 : index
    %15 = vector.load %arg3[%c0_12, %c0_13, %c0_14] : memref<4x8x64xbf16, #tpu.memory_space<vmem>>, vector<1x8x64xbf16>
    %16 = vector.shape_cast %15 : vector<1x8x64xbf16> to vector<8x64xbf16>
    %c0_15 = arith.constant 0 : index
    %c0_16 = arith.constant 0 : index
    %17 = vector.load %arg7[%c0_15, %c0_16] : memref<64x128xbf16, #tpu.memory_space<vmem>>, vector<64x128xbf16>
    %cst_17 = arith.constant dense<0.000000e+00> : vector<8x128xf32>
    %18 = tpu.matmul %16, %17, %cst_17 {dimension_numbers = #tpu.dot_dimension_numbers<[1], [0], [0], [1], [0, 0, 1, 1], [], []>} : vector<8x64xbf16>, vector<64x128xbf16>, vector<8x128xf32> -> vector<8x128xf32>
    %19 = arith.addf %14, %18 : vector<8x128xf32>
    %cst_18 = arith.constant 0.000000e+00 : f32
    %20 = vector.broadcast %cst_18 : f32 to vector<8x128xf32>
    %21 = arith.subf %20, %19 : vector<8x128xf32>
    %22 = math.exp %21 : vector<8x128xf32>
    %cst_19 = arith.constant 1.000000e+00 : f32
    %23 = vector.broadcast %cst_19 : f32 to vector<8x128xf32>
    %24 = arith.addf %23, %22 : vector<8x128xf32>
    %25 = tpu.reciprocal %24 : vector<8x128xf32> -> vector<8x128xf32>
    %26 = arith.mulf %25, %25 : vector<8x128xf32>
    %c0_20 = arith.constant 0 : index
    %c0_21 = arith.constant 0 : index
    %c0_22 = arith.constant 0 : index
    %27 = vector.load %arg4[%c0_20, %c0_21, %c0_22] : memref<4x8x1xf32, #tpu.memory_space<vmem>>, vector<1x8x1xf32>
    %28 = vector.shape_cast %27 : vector<1x8x1xf32> to vector<8x1xf32>
    %29 = vector.broadcast %28 : vector<8x1xf32> to vector<8x128xf32>
    %30 = arith.mulf %26, %29 : vector<8x128xf32>
    %31 = arith.addf %9, %30 : vector<8x128xf32>
    %c1 = arith.constant 1 : index
    %c0_23 = arith.constant 0 : index
    %c0_24 = arith.constant 0 : index
    %32 = vector.load %arg2[%c1, %c0_23, %c0_24] : memref<4x8x128xbf16, #tpu.memory_space<vmem>>, vector<1x8x128xbf16>
    %33 = vector.shape_cast %32 : vector<1x8x128xbf16> to vector<8x128xbf16>
    %c0_25 = arith.constant 0 : index
    %c0_26 = arith.constant 0 : index
    %34 = vector.load %arg6[%c0_25, %c0_26] : memref<128x128xbf16, #tpu.memory_space<vmem>>, vector<128x128xbf16>
    %cst_27 = arith.constant dense<0.000000e+00> : vector<8x128xf32>
    %35 = tpu.matmul %33, %34, %cst_27 {dimension_numbers = #tpu.dot_dimension_numbers<[1], [0], [0], [1], [0, 0, 1, 1], [], []>} : vector<8x128xbf16>, vector<128x128xbf16>, vector<8x128xf32> -> vector<8x128xf32>
    %36 = arith.addf %6, %35 : vector<8x128xf32>
    %c1_28 = arith.constant 1 : index
    %c0_29 = arith.constant 0 : index
    %c0_30 = arith.constant 0 : index
    %37 = vector.load %arg3[%c1_28, %c0_29, %c0_30] : memref<4x8x64xbf16, #tpu.memory_space<vmem>>, vector<1x8x64xbf16>
    %38 = vector.shape_cast %37 : vector<1x8x64xbf16> to vector<8x64xbf16>
    %c0_31 = arith.constant 0 : index
    %c0_32 = arith.constant 0 : index
    %39 = vector.load %arg7[%c0_31, %c0_32] : memref<64x128xbf16, #tpu.memory_space<vmem>>, vector<64x128xbf16>
    %cst_33 = arith.constant dense<0.000000e+00> : vector<8x128xf32>
    %40 = tpu.matmul %38, %39, %cst_33 {dimension_numbers = #tpu.dot_dimension_numbers<[1], [0], [0], [1], [0, 0, 1, 1], [], []>} : vector<8x64xbf16>, vector<64x128xbf16>, vector<8x128xf32> -> vector<8x128xf32>
    %41 = arith.addf %36, %40 : vector<8x128xf32>
    %cst_34 = arith.constant 0.000000e+00 : f32
    %42 = vector.broadcast %cst_34 : f32 to vector<8x128xf32>
    %43 = arith.subf %42, %41 : vector<8x128xf32>
    %44 = math.exp %43 : vector<8x128xf32>
    %cst_35 = arith.constant 1.000000e+00 : f32
    %45 = vector.broadcast %cst_35 : f32 to vector<8x128xf32>
    %46 = arith.addf %45, %44 : vector<8x128xf32>
    %47 = tpu.reciprocal %46 : vector<8x128xf32> -> vector<8x128xf32>
    %48 = arith.mulf %47, %47 : vector<8x128xf32>
    %c1_36 = arith.constant 1 : index
    %c0_37 = arith.constant 0 : index
    %c0_38 = arith.constant 0 : index
    %49 = vector.load %arg4[%c1_36, %c0_37, %c0_38] : memref<4x8x1xf32, #tpu.memory_space<vmem>>, vector<1x8x1xf32>
    %50 = vector.shape_cast %49 : vector<1x8x1xf32> to vector<8x1xf32>
    %51 = vector.broadcast %50 : vector<8x1xf32> to vector<8x128xf32>
    %52 = arith.mulf %48, %51 : vector<8x128xf32>
    %53 = arith.addf %31, %52 : vector<8x128xf32>
    %c2 = arith.constant 2 : index
    %c0_39 = arith.constant 0 : index
    %c0_40 = arith.constant 0 : index
    %54 = vector.load %arg2[%c2, %c0_39, %c0_40] : memref<4x8x128xbf16, #tpu.memory_space<vmem>>, vector<1x8x128xbf16>
    %55 = vector.shape_cast %54 : vector<1x8x128xbf16> to vector<8x128xbf16>
    %c0_41 = arith.constant 0 : index
    %c0_42 = arith.constant 0 : index
    %56 = vector.load %arg6[%c0_41, %c0_42] : memref<128x128xbf16, #tpu.memory_space<vmem>>, vector<128x128xbf16>
    %cst_43 = arith.constant dense<0.000000e+00> : vector<8x128xf32>
    %57 = tpu.matmul %55, %56, %cst_43 {dimension_numbers = #tpu.dot_dimension_numbers<[1], [0], [0], [1], [0, 0, 1, 1], [], []>} : vector<8x128xbf16>, vector<128x128xbf16>, vector<8x128xf32> -> vector<8x128xf32>
    %58 = arith.addf %6, %57 : vector<8x128xf32>
    %c2_44 = arith.constant 2 : index
    %c0_45 = arith.constant 0 : index
    %c0_46 = arith.constant 0 : index
    %59 = vector.load %arg3[%c2_44, %c0_45, %c0_46] : memref<4x8x64xbf16, #tpu.memory_space<vmem>>, vector<1x8x64xbf16>
    %60 = vector.shape_cast %59 : vector<1x8x64xbf16> to vector<8x64xbf16>
    %c0_47 = arith.constant 0 : index
    %c0_48 = arith.constant 0 : index
    %61 = vector.load %arg7[%c0_47, %c0_48] : memref<64x128xbf16, #tpu.memory_space<vmem>>, vector<64x128xbf16>
    %cst_49 = arith.constant dense<0.000000e+00> : vector<8x128xf32>
    %62 = tpu.matmul %60, %61, %cst_49 {dimension_numbers = #tpu.dot_dimension_numbers<[1], [0], [0], [1], [0, 0, 1, 1], [], []>} : vector<8x64xbf16>, vector<64x128xbf16>, vector<8x128xf32> -> vector<8x128xf32>
    %63 = arith.addf %58, %62 : vector<8x128xf32>
    %cst_50 = arith.constant 0.000000e+00 : f32
    %64 = vector.broadcast %cst_50 : f32 to vector<8x128xf32>
    %65 = arith.subf %64, %63 : vector<8x128xf32>
    %66 = math.exp %65 : vector<8x128xf32>
    %cst_51 = arith.constant 1.000000e+00 : f32
    %67 = vector.broadcast %cst_51 : f32 to vector<8x128xf32>
    %68 = arith.addf %67, %66 : vector<8x128xf32>
    %69 = tpu.reciprocal %68 : vector<8x128xf32> -> vector<8x128xf32>
    %70 = arith.mulf %69, %69 : vector<8x128xf32>
    %c2_52 = arith.constant 2 : index
    %c0_53 = arith.constant 0 : index
    %c0_54 = arith.constant 0 : index
    %71 = vector.load %arg4[%c2_52, %c0_53, %c0_54] : memref<4x8x1xf32, #tpu.memory_space<vmem>>, vector<1x8x1xf32>
    %72 = vector.shape_cast %71 : vector<1x8x1xf32> to vector<8x1xf32>
    %73 = vector.broadcast %72 : vector<8x1xf32> to vector<8x128xf32>
    %74 = arith.mulf %70, %73 : vector<8x128xf32>
    %75 = arith.addf %53, %74 : vector<8x128xf32>
    %c3 = arith.constant 3 : index
    %c0_55 = arith.constant 0 : index
    %c0_56 = arith.constant 0 : index
    %76 = vector.load %arg2[%c3, %c0_55, %c0_56] : memref<4x8x128xbf16, #tpu.memory_space<vmem>>, vector<1x8x128xbf16>
    %77 = vector.shape_cast %76 : vector<1x8x128xbf16> to vector<8x128xbf16>
    %c0_57 = arith.constant 0 : index
    %c0_58 = arith.constant 0 : index
    %78 = vector.load %arg6[%c0_57, %c0_58] : memref<128x128xbf16, #tpu.memory_space<vmem>>, vector<128x128xbf16>
    %cst_59 = arith.constant dense<0.000000e+00> : vector<8x128xf32>
    %79 = tpu.matmul %77, %78, %cst_59 {dimension_numbers = #tpu.dot_dimension_numbers<[1], [0], [0], [1], [0, 0, 1, 1], [], []>} : vector<8x128xbf16>, vector<128x128xbf16>, vector<8x128xf32> -> vector<8x128xf32>
    %80 = arith.addf %6, %79 : vector<8x128xf32>
    %c3_60 = arith.constant 3 : index
    %c0_61 = arith.constant 0 : index
    %c0_62 = arith.constant 0 : index
    %81 = vector.load %arg3[%c3_60, %c0_61, %c0_62] : memref<4x8x64xbf16, #tpu.memory_space<vmem>>, vector<1x8x64xbf16>
    %82 = vector.shape_cast %81 : vector<1x8x64xbf16> to vector<8x64xbf16>
    %c0_63 = arith.constant 0 : index
    %c0_64 = arith.constant 0 : index
    %83 = vector.load %arg7[%c0_63, %c0_64] : memref<64x128xbf16, #tpu.memory_space<vmem>>, vector<64x128xbf16>
    %cst_65 = arith.constant dense<0.000000e+00> : vector<8x128xf32>
    %84 = tpu.matmul %82, %83, %cst_65 {dimension_numbers = #tpu.dot_dimension_numbers<[1], [0], [0], [1], [0, 0, 1, 1], [], []>} : vector<8x64xbf16>, vector<64x128xbf16>, vector<8x128xf32> -> vector<8x128xf32>
    %85 = arith.addf %80, %84 : vector<8x128xf32>
    %cst_66 = arith.constant 0.000000e+00 : f32
    %86 = vector.broadcast %cst_66 : f32 to vector<8x128xf32>
    %87 = arith.subf %86, %85 : vector<8x128xf32>
    %88 = math.exp %87 : vector<8x128xf32>
    %cst_67 = arith.constant 1.000000e+00 : f32
    %89 = vector.broadcast %cst_67 : f32 to vector<8x128xf32>
    %90 = arith.addf %89, %88 : vector<8x128xf32>
    %91 = tpu.reciprocal %90 : vector<8x128xf32> -> vector<8x128xf32>
    %92 = arith.mulf %91, %91 : vector<8x128xf32>
    %c3_68 = arith.constant 3 : index
    %c0_69 = arith.constant 0 : index
    %c0_70 = arith.constant 0 : index
    %93 = vector.load %arg4[%c3_68, %c0_69, %c0_70] : memref<4x8x1xf32, #tpu.memory_space<vmem>>, vector<1x8x1xf32>
    %94 = vector.shape_cast %93 : vector<1x8x1xf32> to vector<8x1xf32>
    %95 = vector.broadcast %94 : vector<8x1xf32> to vector<8x128xf32>
    %96 = arith.mulf %92, %95 : vector<8x128xf32>
    %97 = arith.addf %75, %96 : vector<8x128xf32>
    %cst_71 = arith.constant 0.000000e+00 : f32
    %98 = vector.broadcast %cst_71 : f32 to vector<8x128xf32>
    %99 = arith.maximumf %97, %98 : vector<8x128xf32>
    %100 = math.absf %97 : vector<8x128xf32>
    %cst_72 = arith.constant 0.000000e+00 : f32
    %101 = vector.broadcast %cst_72 : f32 to vector<8x128xf32>
    %102 = arith.subf %101, %100 : vector<8x128xf32>
    %103 = math.exp %102 : vector<8x128xf32>
    %cst_73 = arith.constant 1.000000e+00 : f32
    %104 = vector.broadcast %cst_73 : f32 to vector<8x128xf32>
    %105 = arith.addf %104, %103 : vector<8x128xf32>
    %106 = math.log %105 : vector<8x128xf32>
    %107 = arith.addf %99, %106 : vector<8x128xf32>
    %c0_74 = arith.constant 0 : index
    %c0_75 = arith.constant 0 : index
    %108 = vector.load %arg10[%c0_74, %c0_75] : memref<8x128xf32, #tpu.memory_space<vmem>>, vector<8x128xf32>
    tpu.vector_store %arg10[%c0_74, %c0_75], %107 {strides = array<i32>} : memref<8x128xf32, #tpu.memory_space<vmem>>, vector<8x128xf32>,
    return
  }
  func.func @transform_0(%arg0: i32) -> (i32, i32) {
    %c0_i32 = arith.constant 0 : i32
    %c0_i32_0 = arith.constant 0 : i32
    return %arg0, %c0_i32 : i32, i32
  }
  func.func @transform_1(%arg0: i32) -> (i32, i32, i32) {
    %c0_i32 = arith.constant 0 : i32
    %c0_i32_0 = arith.constant 0 : i32
    %c0_i32_1 = arith.constant 0 : i32
    return %c0_i32, %arg0, %c0_i32_0 : i32, i32, i32
  }
  func.func @transform_2(%arg0: i32) -> (i32, i32, i32) {
    %c0_i32 = arith.constant 0 : i32
    %c0_i32_0 = arith.constant 0 : i32
    %c0_i32_1 = arith.constant 0 : i32
    return %c0_i32, %arg0, %c0_i32_0 : i32, i32, i32
  }
  func.func @transform_3(%arg0: i32) -> (i32, i32, i32) {
    %c0_i32 = arith.constant 0 : i32
    %c0_i32_0 = arith.constant 0 : i32
    %c0_i32_1 = arith.constant 0 : i32
    return %c0_i32, %arg0, %c0_i32_0 : i32, i32, i32
  }
  func.func @transform_4(%arg0: i32) -> (i32, i32) {
    %c0_i32 = arith.constant 0 : i32
    %c0_i32_0 = arith.constant 0 : i32
    %c0_i32_1 = arith.constant 0 : i32
    return %c0_i32, %c0_i32_0 : i32, i32
  }
  func.func @transform_5(%arg0: i32) -> (i32, i32) {
    %c0_i32 = arith.constant 0 : i32
    %c0_i32_0 = arith.constant 0 : i32
    %c0_i32_1 = arith.constant 0 : i32
    return %c0_i32, %c0_i32_0 : i32, i32
  }
  func.func @transform_6(%arg0: i32) -> (i32, i32) {
    %c0_i32 = arith.constant 0 : i32
    %c0_i32_0 = arith.constant 0 : i32
    %c0_i32_1 = arith.constant 0 : i32
    return %c0_i32, %c0_i32_0 : i32, i32
  }
  func.func @transform_7(%arg0: i32) -> (i32, i32) {
    %c0_i32 = arith.constant 0 : i32
    %c0_i32_0 = arith.constant 0 : i32
    %c0_i32_1 = arith.constant 0 : i32
    return %c0_i32, %c0_i32_0 : i32, i32
  }
  func.func @transform_8(%arg0: i32) -> i32 {
    %c0_i32 = arith.constant 0 : i32
    %c0_i32_0 = arith.constant 0 : i32
    return %c0_i32 : i32
  }
  func.func @transform_9(%arg0: i32) -> (i32, i32) {
    %c0_i32 = arith.constant 0 : i32
    %c0_i32_0 = arith.constant 0 : i32
    return %arg0, %c0_i32 : i32, i32
  }
}

</mosaic_0001>

<llo_original>
// kernel: conv_layer_forward.1
$region0: #{conv_layer_forward.1}
  #allocation0 [shape = 'u32[]', space=smem, size = 0x4, offset = 0x4, fixed_abs, tag = 'smem constant byte address 0x4 - core index']
  #allocation1 [shape = 'u32[144,128]{1,0:T(1,128)}', space=vmem, size = 0x12000, scoped, tag = 'internal scratch']
  #allocation2 [shape = 'f32[1]{0:T(128)S(6)}', space=smem, size = 0x200, scoped, tag = 'scoped memory for conv_layer_forward.1']
  %s0 = inlined_call_operand.vmem [shape: f32[8,128], index: 0, kind: input, shape index: {}]
  %s1 = inlined_call_operand.vmem [shape: bf16[4,8,128], index: 1, kind: input, shape index: {}]
  %s2 = inlined_call_operand.vmem [shape: bf16[4,8,64], index: 2, kind: input, shape index: {}]
  %s3 = inlined_call_operand.vmem [shape: f32[4,8,1], index: 3, kind: input, shape index: {}]
  %s4 = inlined_call_operand.vmem [shape: bf16[128,128], index: 4, kind: input, shape index: {}]
  %s5 = inlined_call_operand.vmem [shape: bf16[128,128], index: 5, kind: input, shape index: {}]
  %s6 = inlined_call_operand.vmem [shape: bf16[64,128], index: 6, kind: input, shape index: {}]
  %s7 = inlined_call_operand.vmem [shape: f32[1,128], index: 7, kind: input, shape index: {}]
  %s8 = inlined_call_operand.<no memory space> [shape: f32[1], index: 8, kind: input, shape index: {}]
  %s9 = inlined_call_operand.hbm [shape: f32[8,128], index: 9, kind: output, shape index: {}]
  %s10 = sld [smem:[#allocation0]]
  $region46: #{conv_layer_forward.1} parent=0
    _
  %s12 = ssub.s32 1, %s10
  %s13 = scalar_select 0, %s12, %s10
  %14 = sst [smem:[#allocation2]] %s8
  $region1: #{conv_layer_forward.1} parent=0
    #allocation3 [shape = 'u8[4096]{0}', space=vmem, size = 0x1000, scoped, tag = 'output window, operand 0, single buffered']
    #allocation4 [shape = 's32[1]{0}', space=sflag, size = 0x4, scoped, tag = 'scoped memory for conv_layer_forward.1']
    %15 = vsyncpa [#allocation4], 0
    // Predicated region
    $region2: #{conv_layer_forward.1} parent=1 // pred_check
      _
    $region3: #{conv_layer_forward.1} parent=1 // pred_check_branch
      %17 = sbr.rel (0) target = $region5
    $region4: #{conv_layer_forward.1} parent=1 // pred_region
      _
    $region5: #{conv_layer_forward.1} parent=1 // pred_fallthru
      _
    // Predicated region
    $region6: #{conv_layer_forward.1} parent=1 // pred_check
      _
    $region7: #{conv_layer_forward.1} parent=1 // pred_check_branch
      %19 = sbr.rel (0) target = $region9
    $region8: #{conv_layer_forward.1} parent=1 // pred_region
      _
    $region9: #{conv_layer_forward.1} parent=1 // pred_fallthru
      _
    // Predicated region
    $region10: #{conv_layer_forward.1} parent=1 // pred_check
      _
    $region11: #{conv_layer_forward.1} parent=1 // pred_check_branch
      %21 = sbr.rel (0) target = $region13
    $region12: #{conv_layer_forward.1} parent=1 // pred_region
      _
    $region13: #{conv_layer_forward.1} parent=1 // pred_fallthru
      _
    // Predicated region
    $region14: #{conv_layer_forward.1} parent=1 // pred_check
      _
    $region15: #{conv_layer_forward.1} parent=1 // pred_check_branch
      %23 = sbr.rel (0) target = $region17
    $region16: #{conv_layer_forward.1} parent=1 // pred_region
      _
    $region17: #{conv_layer_forward.1} parent=1 // pred_fallthru
      _
    // Predicated region
    $region18: #{conv_layer_forward.1} parent=1 // pred_check
      _
    $region19: #{conv_layer_forward.1} parent=1 // pred_check_branch
      %25 = sbr.rel (0) target = $region21
    $region20: #{conv_layer_forward.1} parent=1 // pred_region
      _
    $region21: #{conv_layer_forward.1} parent=1 // pred_fallthru
      _
    // Predicated region
    $region22: #{conv_layer_forward.1} parent=1 // pred_check
      _
    $region23: #{conv_layer_forward.1} parent=1 // pred_check_branch
      %27 = sbr.rel (0) target = $region25
    $region24: #{conv_layer_forward.1} parent=1 // pred_region
      _
    $region25: #{conv_layer_forward.1} parent=1 // pred_fallthru
      _
    // Predicated region
    $region26: #{conv_layer_forward.1} parent=1 // pred_check
      _
    $region27: #{conv_layer_forward.1} parent=1 // pred_check_branch
      %29 = sbr.rel (0) target = $region29
    $region28: #{conv_layer_forward.1} parent=1 // pred_region
      _
    $region29: #{conv_layer_forward.1} parent=1 // pred_fallthru
      _
    // Predicated region
    $region30: #{conv_layer_forward.1} parent=1 // pred_check
      _
    $region31: #{conv_layer_forward.1} parent=1 // pred_check_branch
      %31 = sbr.rel (0) target = $region33
    $region32: #{conv_layer_forward.1} parent=1 // pred_region
      _
    $region33: #{conv_layer_forward.1} parent=1 // pred_fallthru
      _
    // Predicated region
    $region34: #{conv_layer_forward.1} parent=1 // pred_check
      _
    $region35: #{conv_layer_forward.1} parent=1 // pred_check_branch
      %33 = sbr.rel (0) target = $region37
    $region36: #{conv_layer_forward.1} parent=1 // pred_region
      _
    $region37: #{conv_layer_forward.1} parent=1 // pred_fallthru
      _
    %v35 = vld [vmem:[%s0] sm:$0xff]
    %v36 = vpack.c.bf16 %v35, %v35
    %v37 = vld [vmem:[%s4] sm:$0xf]
    %v38 = vld [vmem:[%s4 + $0x4] sm:$0xf]
    %v39 = vld [vmem:[%s4 + $0x8] sm:$0xf]
    %v40 = vld [vmem:[%s4 + $0xc] sm:$0xf]
    %v41 = vld [vmem:[%s4 + $0x10] sm:$0xf]
    %v42 = vld [vmem:[%s4 + $0x14] sm:$0xf]
    %v43 = vld [vmem:[%s4 + $0x18] sm:$0xf]
    %v44 = vld [vmem:[%s4 + $0x1c] sm:$0xf]
    %v45 = vld [vmem:[%s4 + $0x20] sm:$0xf]
    %v46 = vld [vmem:[%s4 + $0x24] sm:$0xf]
    %v47 = vld [vmem:[%s4 + $0x28] sm:$0xf]
    %v48 = vld [vmem:[%s4 + $0x2c] sm:$0xf]
    %v49 = vld [vmem:[%s4 + $0x30] sm:$0xf]
    %v50 = vld [vmem:[%s4 + $0x34] sm:$0xf]
    %v51 = vld [vmem:[%s4 + $0x38] sm:$0xf]
    %v52 = vld [vmem:[%s4 + $0x3c] sm:$0xf]
    %v53 = vld [vmem:[%s7] sm:$0x1]
    %v55 = vlaneseq
    %v56 = vshrl.u32 %v55, 7
    %v57 = vsub.s32 0, %v56
    %v58 = vrot.slane %v53, %v57
    %v76 = vunpack.c.l.b16 %v37
    %v77 = vunpack.c.l.b16 %v38
    %v78 = vunpack.c.l.b16 %v39
    %v79 = vunpack.c.l.b16 %v40
    %v80 = vunpack.c.l.b16 %v41
    %v81 = vunpack.c.l.b16 %v42
    %v82 = vunpack.c.l.b16 %v43
    %v83 = vunpack.c.l.b16 %v44
    %v84 = vunpack.c.l.b16 %v45
    %v85 = vunpack.c.l.b16 %v46
    %v86 = vunpack.c.l.b16 %v47
    %v87 = vunpack.c.l.b16 %v48
    %v88 = vunpack.c.l.b16 %v49
    %v89 = vunpack.c.l.b16 %v50
    %v90 = vunpack.c.l.b16 %v51
    %v91 = vunpack.c.l.b16 %v52
    %v92 = vpack.c.b16 %v77, %v76
    %v93 = vpack.c.b16 %v79, %v78
    %v94 = vpack.c.b16 %v81, %v80
    %v95 = vpack.c.b16 %v83, %v82
    %v96 = vpack.c.b16 %v85, %v84
    %v97 = vpack.c.b16 %v87, %v86
    %v98 = vpack.c.b16 %v89, %v88
    %v99 = vpack.c.b16 %v91, %v90
    %108 = vmatprep.subr.bf16.mxu0 0
    %109 = vmatpush1.bf16.msra.mxu0 %v99
    %110 = vmatprep.subr.bf16.mxu0 0
    %111 = vmatpush1.bf16.msra.mxu0 %v98
    %112 = vmatprep.subr.bf16.mxu0 0
    %113 = vmatpush1.bf16.msra.mxu0 %v97
    %114 = vmatprep.subr.bf16.mxu0 0
    %115 = vmatpush1.bf16.msra.mxu0 %v96
    %116 = vmatprep.subr.bf16.mxu0 0
    %117 = vmatpush1.bf16.msra.mxu0 %v95
    %118 = vmatprep.subr.bf16.mxu0 0
    %119 = vmatpush1.bf16.msra.mxu0 %v94
    %120 = vmatprep.subr.bf16.mxu0 0
    %121 = vmatpush1.bf16.msra.mxu0 %v93
    %122 = vmatprep.subr.bf16.mxu0 0
    %123 = vmatpush1.bf16.msra.mxu0 %v92
    %124 = vmatprep.subr.bf16.mxu0 0
    %125 = vmatpush2.bf16.msra.mxu0 0
    %126 = vmatprep.subr.bf16.mxu0 0
    %127 = vmatpush2.bf16.msra.mxu0 0
    %128 = vmatprep.subr.bf16.mxu0 0
    %129 = vmatpush2.bf16.msra.mxu0 0
    %130 = vmatprep.subr.bf16.mxu0 0
    %131 = vmatpush2.bf16.msra.mxu0 0
    %132 = vmatprep.subr.bf16.mxu0 0
    %133 = vmatpush2.bf16.msra.mxu0 0
    %134 = vmatprep.subr.bf16.mxu0 0
    %135 = vmatpush2.bf16.msra.mxu0 0
    %136 = vmatprep.subr.bf16.mxu0 0
    %137 = vmatpush2.bf16.msra.mxu0 0
    %138 = vmatprep.subr.bf16.mxu0 0
    %139 = vmatpush2.bf16.msra.mxu0 0
    %140 = vmatprep.mubr.bf16.mxu0 0
    %141 = vmatmul.mubr.bf16.gmra.mxu0 %v36
    %v142 = vpop.f32.mrf.mxu0
    %v143 = vadd.f32 %v58, %v142
    %v144 = vpop.f32.mrf.mxu0
    %v145 = vpop.f32.mrf.mxu0
    %v146 = vpop.f32.mrf.mxu0
    %147 = vdwg.mxu0
    %s148 = sld [smem:[#allocation2]]
    %v149 = vstv %s148
    %v150 = vmul.f32 %v149, %v35
    %v151 = vld [vmem:[%s1] sm:$0xf]
    %v152 = vld [vmem:[%s5] sm:$0xf]
    %v153 = vld [vmem:[%s5 + $0x4] sm:$0xf]
    %v154 = vld [vmem:[%s5 + $0x8] sm:$0xf]
    %v155 = vld [vmem:[%s5 + $0xc] sm:$0xf]
    %v156 = vld [vmem:[%s5 + $0x10] sm:$0xf]
    %v157 = vld [vmem:[%s5 + $0x14] sm:$0xf]
    %v158 = vld [vmem:[%s5 + $0x18] sm:$0xf]
    %v159 = vld [vmem:[%s5 + $0x1c] sm:$0xf]
    %v160 = vld [vmem:[%s5 + $0x20] sm:$0xf]
    %v161 = vld [vmem:[%s5 + $0x24] sm:$0xf]
    %v162 = vld [vmem:[%s5 + $0x28] sm:$0xf]
    %v163 = vld [vmem:[%s5 + $0x2c] sm:$0xf]
    %v164 = vld [vmem:[%s5 + $0x30] sm:$0xf]
    %v165 = vld [vmem:[%s5 + $0x34] sm:$0xf]
    %v166 = vld [vmem:[%s5 + $0x38] sm:$0xf]
    %v167 = vld [vmem:[%s5 + $0x3c] sm:$0xf]
    %v184 = vunpack.c.l.b16 %v152
    %v185 = vunpack.c.l.b16 %v153
    %v186 = vunpack.c.l.b16 %v154
    %v187 = vunpack.c.l.b16 %v155
    %v188 = vunpack.c.l.b16 %v156
    %v189 = vunpack.c.l.b16 %v157
    %v190 = vunpack.c.l.b16 %v158
    %v191 = vunpack.c.l.b16 %v159
    %v192 = vunpack.c.l.b16 %v160
    %v193 = vunpack.c.l.b16 %v161
    %v194 = vunpack.c.l.b16 %v162
    %v195 = vunpack.c.l.b16 %v163
    %v196 = vunpack.c.l.b16 %v164
    %v197 = vunpack.c.l.b16 %v165
    %v198 = vunpack.c.l.b16 %v166
    %v199 = vunpack.c.l.b16 %v167
    %v200 = vpack.c.b16 %v185, %v184
    %v201 = vpack.c.b16 %v187, %v186
    %v202 = vpack.c.b16 %v189, %v188
    %v203 = vpack.c.b16 %v191, %v190
    %v204 = vpack.c.b16 %v193, %v192
    %v205 = vpack.c.b16 %v195, %v194
    %v206 = vpack.c.b16 %v197, %v196
    %v207 = vpack.c.b16 %v199, %v198
    %216 = vmatprep.subr.bf16.mxu0 0
    %217 = vmatpush1.bf16.msra.mxu0 %v207
    %218 = vmatprep.subr.bf16.mxu0 0
    %219 = vmatpush1.bf16.msra.mxu0 %v206
    %220 = vmatprep.subr.bf16.mxu0 0
    %221 = vmatpush1.bf16.msra.mxu0 %v205
    %222 = vmatprep.subr.bf16.mxu0 0
    %223 = vmatpush1.bf16.msra.mxu0 %v204
    %224 = vmatprep.subr.bf16.mxu0 0
    %225 = vmatpush1.bf16.msra.mxu0 %v203
    %226 = vmatprep.subr.bf16.mxu0 0
    %227 = vmatpush1.bf16.msra.mxu0 %v202
    %228 = vmatprep.subr.bf16.mxu0 0
    %229 = vmatpush1.bf16.msra.mxu0 %v201
    %230 = vmatprep.subr.bf16.mxu0 0
    %231 = vmatpush1.bf16.msra.mxu0 %v200
    %232 = vmatprep.subr.bf16.mxu0 0
    %233 = vmatpush2.bf16.msra.mxu0 0
    %234 = vmatprep.subr.bf16.mxu0 0
    %235 = vmatpush2.bf16.msra.mxu0 0
    %236 = vmatprep.subr.bf16.mxu0 0
    %237 = vmatpush2.bf16.msra.mxu0 0
    %238 = vmatprep.subr.bf16.mxu0 0
    %239 = vmatpush2.bf16.msra.mxu0 0
    %240 = vmatprep.subr.bf16.mxu0 0
    %241 = vmatpush2.bf16.msra.mxu0 0
    %242 = vmatprep.subr.bf16.mxu0 0
    %243 = vmatpush2.bf16.msra.mxu0 0
    %244 = vmatprep.subr.bf16.mxu0 0
    %245 = vmatpush2.bf16.msra.mxu0 0
    %246 = vmatprep.subr.bf16.mxu0 0
    %247 = vmatpush2.bf16.msra.mxu0 0
    %248 = vmatprep.mubr.bf16.mxu0 0
    %249 = vmatmul.mubr.bf16.gmra.mxu0 %v151
    %v250 = vpop.f32.mrf.mxu0
    %v251 = vadd.f32 0.0, %v250
    %v252 = vpop.f32.mrf.mxu0
    %v253 = vpop.f32.mrf.mxu0
    %v254 = vpop.f32.mrf.mxu0
    %255 = vdwg.mxu0
    %v256 = vadd.f32 %v143, %v251
    %v257 = vld [vmem:[%s2] sm:$0xf]
    %v258 = vld [vmem:[%s6] sm:$0xf]
    %v259 = vld [vmem:[%s6 + $0x4] sm:$0xf]
    %v260 = vld [vmem:[%s6 + $0x8] sm:$0xf]
    %v261 = vld [vmem:[%s6 + $0xc] sm:$0xf]
    %v262 = vld [vmem:[%s6 + $0x10] sm:$0xf]
    %v263 = vld [vmem:[%s6 + $0x14] sm:$0xf]
    %v264 = vld [vmem:[%s6 + $0x18] sm:$0xf]
    %v265 = vld [vmem:[%s6 + $0x1c] sm:$0xf]
    %v274 = vunpack.c.l.b16 %v258
    %v275 = vunpack.c.l.b16 %v259
    %v276 = vunpack.c.l.b16 %v260
    %v277 = vunpack.c.l.b16 %v261
    %v278 = vunpack.c.l.b16 %v262
    %v279 = vunpack.c.l.b16 %v263
    %v280 = vunpack.c.l.b16 %v264
    %v281 = vunpack.c.l.b16 %v265
    %v282 = vpack.c.b16 %v275, %v274
    %v283 = vpack.c.b16 %v277, %v276
    %v284 = vpack.c.b16 %v279, %v278
    %v285 = vpack.c.b16 %v281, %v280
    %vm290 = vcmask 523264
    %v292 = vsel %vm290, %v257, 0
    %294 = vmatprep.subr.bf16.mxu0 0
    %295 = vmatpush1.bf16.msra.mxu0 0
    %296 = vmatprep.subr.bf16.mxu0 0
    %297 = vmatpush1.bf16.msra.mxu0 0
    %298 = vmatprep.subr.bf16.mxu0 0
    %299 = vmatpush1.bf16.msra.mxu0 0
    %300 = vmatprep.subr.bf16.mxu0 0
    %301 = vmatpush1.bf16.msra.mxu0 0
    %302 = vmatprep.subr.bf16.mxu0 0
    %303 = vmatpush1.bf16.msra.mxu0 %v285
    %304 = vmatprep.subr.bf16.mxu0 0
    %305 = vmatpush1.bf16.msra.mxu0 %v284
    %306 = vmatprep.subr.bf16.mxu0 0
    %307 = vmatpush1.bf16.msra.mxu0 %v283
    %308 = vmatprep.subr.bf16.mxu0 0
    %309 = vmatpush1.bf16.msra.mxu0 %v282
    %310 = vmatprep.subr.bf16.mxu0 0
    %311 = vmatpush2.bf16.msra.mxu0 0
    %312 = vmatprep.subr.bf16.mxu0 0
    %313 = vmatpush2.bf16.msra.mxu0 0
    %314 = vmatprep.subr.bf16.mxu0 0
    %315 = vmatpush2.bf16.msra.mxu0 0
    %316 = vmatprep.subr.bf16.mxu0 0
    %317 = vmatpush2.bf16.msra.mxu0 0
    %318 = vmatprep.subr.bf16.mxu0 0
    %319 = vmatpush2.bf16.msra.mxu0 0
    %320 = vmatprep.subr.bf16.mxu0 0
    %321 = vmatpush2.bf16.msra.mxu0 0
    %322 = vmatprep.subr.bf16.mxu0 0
    %323 = vmatpush2.bf16.msra.mxu0 0
    %324 = vmatprep.subr.bf16.mxu0 0
    %325 = vmatpush2.bf16.msra.mxu0 0
    %326 = vmatprep.mubr.bf16.mxu0 0
    %327 = vmatmul.mubr.bf16.gmra.mxu0 %v292
    %v328 = vpop.f32.mrf.mxu0
    %v329 = vadd.f32 0.0, %v328
    %v330 = vpop.f32.mrf.mxu0
    %v331 = vpop.f32.mrf.mxu0
    %v332 = vpop.f32.mrf.mxu0
    %333 = vdwg.mxu0
    %v334 = vadd.f32 %v256, %v329
    %v335 = vsub.f32 0.0, %v334
    %v336 = vmul.f32 %v335, 1.442695
    %v337 = vpow.pop %v336
    %v338 = vadd.f32 %v337, 1.0
    %v339 = vrcp.pop %v338
    %v340 = vmul.f32 %v339, %v339
    %v341 = vld [vmem:[%s3] sm:$0xff]
    %343 = vset.pattern.permute.xlu0 0
    %344 = vperm.xlu0 %343, %v341
    %v345 = vpop.permute.xlu0 %344
    %v347 = vmul.f32 %v340, %v345
    %v348 = vadd.f32 %v150, %v347
    %s349 = scalar_lea.vmem %s1, 4
    %v350 = vld [vmem:[%s349] sm:$0xf]
    %351 = vmatprep.subr.bf16.mxu0 0
    %352 = vmatpush1.bf16.msra.mxu0 %v207
    %353 = vmatprep.subr.bf16.mxu0 0
    %354 = vmatpush1.bf16.msra.mxu0 %v206
    %355 = vmatprep.subr.bf16.mxu0 0
    %356 = vmatpush1.bf16.msra.mxu0 %v205
    %357 = vmatprep.subr.bf16.mxu0 0
    %358 = vmatpush1.bf16.msra.mxu0 %v204
    %359 = vmatprep.subr.bf16.mxu0 0
    %360 = vmatpush1.bf16.msra.mxu0 %v203
    %361 = vmatprep.subr.bf16.mxu0 0
    %362 = vmatpush1.bf16.msra.mxu0 %v202
    %363 = vmatprep.subr.bf16.mxu0 0
    %364 = vmatpush1.bf16.msra.mxu0 %v201
    %365 = vmatprep.subr.bf16.mxu0 0
    %366 = vmatpush1.bf16.msra.mxu0 %v200
    %367 = vmatprep.subr.bf16.mxu0 0
    %368 = vmatpush2.bf16.msra.mxu0 0
    %369 = vmatprep.subr.bf16.mxu0 0
    %370 = vmatpush2.bf16.msra.mxu0 0
    %371 = vmatprep.subr.bf16.mxu0 0
    %372 = vmatpush2.bf16.msra.mxu0 0
    %373 = vmatprep.subr.bf16.mxu0 0
    %374 = vmatpush2.bf16.msra.mxu0 0
    %375 = vmatprep.subr.bf16.mxu0 0
    %376 = vmatpush2.bf16.msra.mxu0 0
    %377 = vmatprep.subr.bf16.mxu0 0
    %378 = vmatpush2.bf16.msra.mxu0 0
    %379 = vmatprep.subr.bf16.mxu0 0
    %380 = vmatpush2.bf16.msra.mxu0 0
    %381 = vmatprep.subr.bf16.mxu0 0
    %382 = vmatpush2.bf16.msra.mxu0 0
    %383 = vmatprep.mubr.bf16.mxu0 0
    %384 = vmatmul.mubr.bf16.gmra.mxu0 %v350
    %v385 = vpop.f32.mrf.mxu0
    %v386 = vadd.f32 0.0, %v385
    %v387 = vpop.f32.mrf.mxu0
    %v388 = vpop.f32.mrf.mxu0
    %v389 = vpop.f32.mrf.mxu0
    %390 = vdwg.mxu0
    %v391 = vadd.f32 %v143, %v386
    %s392 = scalar_lea.vmem %s2, 4
    %v393 = vld [vmem:[%s392] sm:$0xf]
    %v395 = vsel %vm290, %v393, 0
    %397 = vmatprep.subr.bf16.mxu0 0
    %398 = vmatpush1.bf16.msra.mxu0 0
    %399 = vmatprep.subr.bf16.mxu0 0
    %400 = vmatpush1.bf16.msra.mxu0 0
    %401 = vmatprep.subr.bf16.mxu0 0
    %402 = vmatpush1.bf16.msra.mxu0 0
    %403 = vmatprep.subr.bf16.mxu0 0
    %404 = vmatpush1.bf16.msra.mxu0 0
    %405 = vmatprep.subr.bf16.mxu0 0
    %406 = vmatpush1.bf16.msra.mxu0 %v285
    %407 = vmatprep.subr.bf16.mxu0 0
    %408 = vmatpush1.bf16.msra.mxu0 %v284
    %409 = vmatprep.subr.bf16.mxu0 0
    %410 = vmatpush1.bf16.msra.mxu0 %v283
    %411 = vmatprep.subr.bf16.mxu0 0
    %412 = vmatpush1.bf16.msra.mxu0 %v282
    %413 = vmatprep.subr.bf16.mxu0 0
    %414 = vmatpush2.bf16.msra.mxu0 0
    %415 = vmatprep.subr.bf16.mxu0 0
    %416 = vmatpush2.bf16.msra.mxu0 0
    %417 = vmatprep.subr.bf16.mxu0 0
    %418 = vmatpush2.bf16.msra.mxu0 0
    %419 = vmatprep.subr.bf16.mxu0 0
    %420 = vmatpush2.bf16.msra.mxu0 0
    %421 = vmatprep.subr.bf16.mxu0 0
    %422 = vmatpush2.bf16.msra.mxu0 0
    %423 = vmatprep.subr.bf16.mxu0 0
    %424 = vmatpush2.bf16.msra.mxu0 0
    %425 = vmatprep.subr.bf16.mxu0 0
    %426 = vmatpush2.bf16.msra.mxu0 0
    %427 = vmatprep.subr.bf16.mxu0 0
    %428 = vmatpush2.bf16.msra.mxu0 0
    %429 = vmatprep.mubr.bf16.mxu0 0
    %430 = vmatmul.mubr.bf16.gmra.mxu0 %v395
    %v431 = vpop.f32.mrf.mxu0
    %v432 = vadd.f32 0.0, %v431
    %v433 = vpop.f32.mrf.mxu0
    %v434 = vpop.f32.mrf.mxu0
    %v435 = vpop.f32.mrf.mxu0
    %436 = vdwg.mxu0
    %v437 = vadd.f32 %v391, %v432
    %v438 = vsub.f32 0.0, %v437
    %v439 = vmul.f32 %v438, 1.442695
    %v440 = vpow.pop %v439
    %v441 = vadd.f32 %v440, 1.0
    %v442 = vrcp.pop %v441
    %v443 = vmul.f32 %v442, %v442
    %s444 = scalar_lea.vmem %s3, 8
    %v445 = vld [vmem:[%s444] sm:$0xff]
    %447 = vset.pattern.permute.xlu0 0
    %448 = vperm.xlu0 %447, %v445
    %v449 = vpop.permute.xlu0 %448
    %v451 = vmul.f32 %v443, %v449
    %v452 = vadd.f32 %v348, %v451
    %s453 = scalar_lea.vmem %s1, 8
    %v454 = vld [vmem:[%s453] sm:$0xf]
    %455 = vmatprep.subr.bf16.mxu0 0
    %456 = vmatpush1.bf16.msra.mxu0 %v207
    %457 = vmatprep.subr.bf16.mxu0 0
    %458 = vmatpush1.bf16.msra.mxu0 %v206
    %459 = vmatprep.subr.bf16.mxu0 0
    %460 = vmatpush1.bf16.msra.mxu0 %v205
    %461 = vmatprep.subr.bf16.mxu0 0
    %462 = vmatpush1.bf16.msra.mxu0 %v204
    %463 = vmatprep.subr.bf16.mxu0 0
    %464 = vmatpush1.bf16.msra.mxu0 %v203
    %465 = vmatprep.subr.bf16.mxu0 0
    %466 = vmatpush1.bf16.msra.mxu0 %v202
    %467 = vmatprep.subr.bf16.mxu0 0
    %468 = vmatpush1.bf16.msra.mxu0 %v201
    %469 = vmatprep.subr.bf16.mxu0 0
    %470 = vmatpush1.bf16.msra.mxu0 %v200
    %471 = vmatprep.subr.bf16.mxu0 0
    %472 = vmatpush2.bf16.msra.mxu0 0
    %473 = vmatprep.subr.bf16.mxu0 0
    %474 = vmatpush2.bf16.msra.mxu0 0
    %475 = vmatprep.subr.bf16.mxu0 0
    %476 = vmatpush2.bf16.msra.mxu0 0
    %477 = vmatprep.subr.bf16.mxu0 0
    %478 = vmatpush2.bf16.msra.mxu0 0
    %479 = vmatprep.subr.bf16.mxu0 0
    %480 = vmatpush2.bf16.msra.mxu0 0
    %481 = vmatprep.subr.bf16.mxu0 0
    %482 = vmatpush2.bf16.msra.mxu0 0
    %483 = vmatprep.subr.bf16.mxu0 0
    %484 = vmatpush2.bf16.msra.mxu0 0
    %485 = vmatprep.subr.bf16.mxu0 0
    %486 = vmatpush2.bf16.msra.mxu0 0
    %487 = vmatprep.mubr.bf16.mxu0 0
    %488 = vmatmul.mubr.bf16.gmra.mxu0 %v454
    %v489 = vpop.f32.mrf.mxu0
    %v490 = vadd.f32 0.0, %v489
    %v491 = vpop.f32.mrf.mxu0
    %v492 = vpop.f32.mrf.mxu0
    %v493 = vpop.f32.mrf.mxu0
    %494 = vdwg.mxu0
    %v495 = vadd.f32 %v143, %v490
    %s496 = scalar_lea.vmem %s2, 8
    %v497 = vld [vmem:[%s496] sm:$0xf]
    %v499 = vsel %vm290, %v497, 0
    %501 = vmatprep.subr.bf16.mxu0 0
    %502 = vmatpush1.bf16.msra.mxu0 0
    %503 = vmatprep.subr.bf16.mxu0 0
    %504 = vmatpush1.bf16.msra.mxu0 0
    %505 = vmatprep.subr.bf16.mxu0 0
    %506 = vmatpush1.bf16.msra.mxu0 0
    %507 = vmatprep.subr.bf16.mxu0 0
    %508 = vmatpush1.bf16.msra.mxu0 0
    %509 = vmatprep.subr.bf16.mxu0 0
    %510 = vmatpush1.bf16.msra.mxu0 %v285
    %511 = vmatprep.subr.bf16.mxu0 0
    %512 = vmatpush1.bf16.msra.mxu0 %v284
    %513 = vmatprep.subr.bf16.mxu0 0
    %514 = vmatpush1.bf16.msra.mxu0 %v283
    %515 = vmatprep.subr.bf16.mxu0 0
    %516 = vmatpush1.bf16.msra.mxu0 %v282
    %517 = vmatprep.subr.bf16.mxu0 0
    %518 = vmatpush2.bf16.msra.mxu0 0
    %519 = vmatprep.subr.bf16.mxu0 0
    %520 = vmatpush2.bf16.msra.mxu0 0
    %521 = vmatprep.subr.bf16.mxu0 0
    %522 = vmatpush2.bf16.msra.mxu0 0
    %523 = vmatprep.subr.bf16.mxu0 0
    %524 = vmatpush2.bf16.msra.mxu0 0
    %525 = vmatprep.subr.bf16.mxu0 0
    %526 = vmatpush2.bf16.msra.mxu0 0
    %527 = vmatprep.subr.bf16.mxu0 0
    %528 = vmatpush2.bf16.msra.mxu0 0
    %529 = vmatprep.subr.bf16.mxu0 0
    %530 = vmatpush2.bf16.msra.mxu0 0
    %531 = vmatprep.subr.bf16.mxu0 0
    %532 = vmatpush2.bf16.msra.mxu0 0
    %533 = vmatprep.mubr.bf16.mxu0 0
    %534 = vmatmul.mubr.bf16.gmra.mxu0 %v499
    %v535 = vpop.f32.mrf.mxu0
    %v536 = vadd.f32 0.0, %v535
    %v537 = vpop.f32.mrf.mxu0
    %v538 = vpop.f32.mrf.mxu0
    %v539 = vpop.f32.mrf.mxu0
    %540 = vdwg.mxu0
    %v541 = vadd.f32 %v495, %v536
    %v542 = vsub.f32 0.0, %v541
    %v543 = vmul.f32 %v542, 1.442695
    %v544 = vpow.pop %v543
    %v545 = vadd.f32 %v544, 1.0
    %v546 = vrcp.pop %v545
    %v547 = vmul.f32 %v546, %v546
    %s548 = scalar_lea.vmem %s3, 16
    %v549 = vld [vmem:[%s548] sm:$0xff]
    %551 = vset.pattern.permute.xlu0 0
    %552 = vperm.xlu0 %551, %v549
    %v553 = vpop.permute.xlu0 %552
    %v555 = vmul.f32 %v547, %v553
    %v556 = vadd.f32 %v452, %v555
    %s557 = scalar_lea.vmem %s1, 12
    %v558 = vld [vmem:[%s557] sm:$0xf]
    %559 = vmatprep.subr.bf16.mxu0 0
    %560 = vmatpush1.bf16.msra.mxu0 %v207
    %561 = vmatprep.subr.bf16.mxu0 0
    %562 = vmatpush1.bf16.msra.mxu0 %v206
    %563 = vmatprep.subr.bf16.mxu0 0
    %564 = vmatpush1.bf16.msra.mxu0 %v205
    %565 = vmatprep.subr.bf16.mxu0 0
    %566 = vmatpush1.bf16.msra.mxu0 %v204
    %567 = vmatprep.subr.bf16.mxu0 0
    %568 = vmatpush1.bf16.msra.mxu0 %v203
    %569 = vmatprep.subr.bf16.mxu0 0
    %570 = vmatpush1.bf16.msra.mxu0 %v202
    %571 = vmatprep.subr.bf16.mxu0 0
    %572 = vmatpush1.bf16.msra.mxu0 %v201
    %573 = vmatprep.subr.bf16.mxu0 0
    %574 = vmatpush1.bf16.msra.mxu0 %v200
    %575 = vmatprep.subr.bf16.mxu0 0
    %576 = vmatpush2.bf16.msra.mxu0 0
    %577 = vmatprep.subr.bf16.mxu0 0
    %578 = vmatpush2.bf16.msra.mxu0 0
    %579 = vmatprep.subr.bf16.mxu0 0
    %580 = vmatpush2.bf16.msra.mxu0 0
    %581 = vmatprep.subr.bf16.mxu0 0
    %582 = vmatpush2.bf16.msra.mxu0 0
    %583 = vmatprep.subr.bf16.mxu0 0
    %584 = vmatpush2.bf16.msra.mxu0 0
    %585 = vmatprep.subr.bf16.mxu0 0
    %586 = vmatpush2.bf16.msra.mxu0 0
    %587 = vmatprep.subr.bf16.mxu0 0
    %588 = vmatpush2.bf16.msra.mxu0 0
    %589 = vmatprep.subr.bf16.mxu0 0
    %590 = vmatpush2.bf16.msra.mxu0 0
    %591 = vmatprep.mubr.bf16.mxu0 0
    %592 = vmatmul.mubr.bf16.gmra.mxu0 %v558
    %v593 = vpop.f32.mrf.mxu0
    %v594 = vadd.f32 0.0, %v593
    %v595 = vpop.f32.mrf.mxu0
    %v596 = vpop.f32.mrf.mxu0
    %v597 = vpop.f32.mrf.mxu0
    %598 = vdwg.mxu0
    %v599 = vadd.f32 %v143, %v594
    %s600 = scalar_lea.vmem %s2, 12
    %v601 = vld [vmem:[%s600] sm:$0xf]
    %v603 = vsel %vm290, %v601, 0
    %605 = vmatprep.subr.bf16.mxu0 0
    %606 = vmatpush1.bf16.msra.mxu0 0
    %607 = vmatprep.subr.bf16.mxu0 0
    %608 = vmatpush1.bf16.msra.mxu0 0
    %609 = vmatprep.subr.bf16.mxu0 0
    %610 = vmatpush1.bf16.msra.mxu0 0
    %611 = vmatprep.subr.bf16.mxu0 0
    %612 = vmatpush1.bf16.msra.mxu0 0
    %613 = vmatprep.subr.bf16.mxu0 0
    %614 = vmatpush1.bf16.msra.mxu0 %v285
    %615 = vmatprep.subr.bf16.mxu0 0
    %616 = vmatpush1.bf16.msra.mxu0 %v284
    %617 = vmatprep.subr.bf16.mxu0 0
    %618 = vmatpush1.bf16.msra.mxu0 %v283
    %619 = vmatprep.subr.bf16.mxu0 0
    %620 = vmatpush1.bf16.msra.mxu0 %v282
    %621 = vmatprep.subr.bf16.mxu0 0
    %622 = vmatpush2.bf16.msra.mxu0 0
    %623 = vmatprep.subr.bf16.mxu0 0
    %624 = vmatpush2.bf16.msra.mxu0 0
    %625 = vmatprep.subr.bf16.mxu0 0
    %626 = vmatpush2.bf16.msra.mxu0 0
    %627 = vmatprep.subr.bf16.mxu0 0
    %628 = vmatpush2.bf16.msra.mxu0 0
    %629 = vmatprep.subr.bf16.mxu0 0
    %630 = vmatpush2.bf16.msra.mxu0 0
    %631 = vmatprep.subr.bf16.mxu0 0
    %632 = vmatpush2.bf16.msra.mxu0 0
    %633 = vmatprep.subr.bf16.mxu0 0
    %634 = vmatpush2.bf16.msra.mxu0 0
    %635 = vmatprep.subr.bf16.mxu0 0
    %636 = vmatpush2.bf16.msra.mxu0 0
    %637 = vmatprep.mubr.bf16.mxu0 0
    %638 = vmatmul.mubr.bf16.gmra.mxu0 %v603
    %v639 = vpop.f32.mrf.mxu0
    %v640 = vadd.f32 0.0, %v639
    %v641 = vpop.f32.mrf.mxu0
    %v642 = vpop.f32.mrf.mxu0
    %v643 = vpop.f32.mrf.mxu0
    %644 = vdwg.mxu0
    %v645 = vadd.f32 %v599, %v640
    %v646 = vsub.f32 0.0, %v645
    %v647 = vmul.f32 %v646, 1.442695
    %v648 = vpow.pop %v647
    %v649 = vadd.f32 %v648, 1.0
    %v650 = vrcp.pop %v649
    %v651 = vmul.f32 %v650, %v650
    %s652 = scalar_lea.vmem %s3, 24
    %v653 = vld [vmem:[%s652] sm:$0xff]
    %655 = vset.pattern.permute.xlu0 0
    %656 = vperm.xlu0 %655, %v653
    %v657 = vpop.permute.xlu0 %656
    %v659 = vmul.f32 %v651, %v657
    %v660 = vadd.f32 %v556, %v659
    %v661 = vmax.f32 %v660, 0.0
    %v662 = vand.u32 2147483647, %v660
    %v663 = vsub.f32 0.0, %v662
    %v664 = vmul.f32 %v663, 1.442695
    %v665 = vpow.pop %v664
    %v666 = vadd.f32 %v665, 1.0
    %v667 = vlog2.pop %v666
    %v668 = vmul.f32 %v667, 0.6931472
    %v669 = vadd.f32 %v661, %v668
    %670 = vst [vmem:[#allocation3] sm:$0xff] %v669
    // Predicated region
    $region38: #{conv_layer_forward.1} parent=1 // pred_check
      _
    $region39: #{conv_layer_forward.1} parent=1 // pred_check_branch
      %672 = sbr.rel (0) target = $region41
    $region40: #{conv_layer_forward.1} parent=1 // pred_region
      %s674 = ssub.s32 128, 128
      %675 = vsyncadd [#allocation4], %s674
      %s677 = sshll.u32 [#allocation3], 4
      %s678 = int_to_ptr.vmem [resolvable:$true] %s677
      %680 = dma.vmem_to_hbm [thread:$0]  %s678, 128, %s9, [#allocation4]
    $region41: #{conv_layer_forward.1} parent=1 // pred_fallthru
      _
    // Predicated region
    $region42: #{conv_layer_forward.1} parent=1 // pred_check
      _
    $region43: #{conv_layer_forward.1} parent=1 // pred_check_branch
      %682 = sbr.rel (0) target = $region45
    $region44: #{conv_layer_forward.1} parent=1 // pred_region
      %683 = dma.done [#allocation4], 128
    $region45: #{conv_layer_forward.1} parent=1 // pred_fallthru
      _
    %684 = vsyncpa [#allocation4], 1

</llo_original>
